<compile_context>
chip_gen: v7x
topology: tpu7x:2x2x1
jax: 0.10.0
libtpu: 0.0.40
codegen_flags: <defaults>
</compile_context>

<pallas_src>
import functools

import jax
import jax.numpy as jnp
from jax.experimental import pallas as pl
from jax.experimental.pallas import tpu as pltpu


def _rpn_kernel(xcol_ref, wcol_ref, bconv_ref, whead_ref, bhead_ref, out_ref):
    """One row-block tile per grid step.

    xcol_ref:  (TQ, 9*Cin)         bf16  im2col activation rows
    wcol_ref:  (9*Cin, Cmid)       bf16  conv weight, im2col layout
    bconv_ref: (1, Cmid)           f32   conv bias
    whead_ref: (Cmid, CHEAD_PAD)   bf16  [wcls | wreg | 0-pad] fused head weight
    bhead_ref: (1, CHEAD_PAD)      f32   fused head bias (0-padded)
    out_ref:   (TQ, CHEAD_PAD)     bf16  fused, lane-dense head output
    """
    # 3x3 conv as a single im2col matmul on the MXU, f32 accumulation.
    acc = jnp.dot(xcol_ref[...], wcol_ref[...],
                  preferred_element_type=jnp.float32)
    # Bias + ReLU in f32 vregs.
    h = jnp.maximum(acc + bconv_ref[...], 0.0)
    # Fused cls+reg head: one matmul, one lane-dense (128-wide) store.
    out = jnp.dot(h.astype(jnp.bfloat16), whead_ref[...],
                  preferred_element_type=jnp.float32) + bhead_ref[...]
    out_ref[...] = out.astype(out_ref.dtype)


def _pick_vmem_limit_bytes():
    """Per-generation VMEM budget: ~3/4 of physical, capped at 96 MiB."""
    try:
        physical = pltpu.get_tpu_info().vmem_capacity_bytes
    except Exception:
        physical = 64 * 1024 * 1024          # v7x-safe fallback
    return int(min(physical * 3 // 4, 96 * 1024 * 1024))


def rpn_forward(x_nchw, params, *, num_anchors=9, row_block=256):
    """x_nchw: (N, Cin, H, W) float32.

    Returns (cls_pred (N, H*W*A, 2), reg_pred (N, H*W*A, 4)) matching the
    PyTorch module semantics (permute(0,2,3,1) + view).
    """
    wconv, bconv, wcls, bcls, wreg, breg = params
    N, Cin, H, W = x_nchw.shape
    Cmid = wconv.shape[-1]
    Ccls = num_anchors * 2
    Creg = num_anchors * 4
    Chead = Ccls + Creg
    Chead_pad = pl.cdiv(Chead, 128) * 128          # lane-dense output width
    K9 = 9 * Cin
    total_rows = N * H * W

    # --- wrapper-side preprocessing (single fused XLA pass at these sizes) ---
    # Cast to bf16 BEFORE the 9x im2col expansion so the biggest intermediate
    # (and its HBM write) is half-width.
    x_nhwc = jnp.transpose(x_nchw, (0, 2, 3, 1)).astype(jnp.bfloat16)
    x_pad = jnp.pad(x_nhwc, ((0, 0), (1, 1), (1, 1), (0, 0)))
    taps = [x_pad[:, kh:kh + H, kw:kw + W, :]
            for kh in range(3) for kw in range(3)]          # 9 x (N,H,W,Cin)
    x_col = jnp.stack(taps, axis=3).reshape(total_rows, K9)  # (N*H*W, 9*Cin)

    # Row-block tiling: pad rows up to a multiple of the (8-aligned) block so
    # arbitrary feature maps (e.g. 50x50 = 2500 rows) work with an unmasked
    # lane-dense store path.
    tq = min(row_block, pl.cdiv(total_rows, 8) * 8)
    tq = max(8, (tq // 8) * 8)
    nrow = pl.cdiv(total_rows, tq)
    rows_pad = nrow * tq
    if rows_pad != total_rows:
        x_col = jnp.pad(x_col, ((0, rows_pad - total_rows), (0, 0)))

    # Conv weight in im2col layout; fused + lane-padded head weight/bias.
    w_col = wconv.reshape(K9, Cmid).astype(jnp.bfloat16)
    w_head = jnp.concatenate([wcls, wreg], axis=1)            # (Cmid, 54)
    w_head = jnp.pad(w_head, ((0, 0), (0, Chead_pad - Chead))).astype(jnp.bfloat16)
    b_head = jnp.concatenate([bcls, breg], axis=1)            # (1, 54), f32
    b_head = jnp.pad(b_head, ((0, 0), (0, Chead_pad - Chead)))

    # Constant-index operands: block index never changes -> single buffer.
    const_spec = functools.partial(pl.BlockSpec, pipeline_mode=pl.Buffered(1))

    out = pl.pallas_call(
        _rpn_kernel,
        out_shape=jax.ShapeDtypeStruct((rows_pad, Chead_pad), jnp.bfloat16),
        grid_spec=pltpu.PrefetchScalarGridSpec(
            num_scalar_prefetch=0,
            grid=(nrow,),
            in_specs=[
                pl.BlockSpec((tq, K9), lambda r: (r, 0)),
                const_spec((K9, Cmid), lambda r: (0, 0)),
                const_spec((1, Cmid), lambda r: (0, 0)),
                const_spec((Cmid, Chead_pad), lambda r: (0, 0)),
                const_spec((1, Chead_pad), lambda r: (0, 0)),
            ],
            out_specs=pl.BlockSpec((tq, Chead_pad), lambda r: (r, 0)),
        ),
        compiler_params=pltpu.CompilerParams(
            dimension_semantics=("parallel",),
            vmem_limit_bytes=_pick_vmem_limit_bytes()),
    )(x_col, w_col, bconv, w_head, b_head)

    # Drop row padding, split the fused head back into cls/reg and apply the
    # PyTorch view semantics.
    out = out[:total_rows].astype(x_nchw.dtype)
    cls_pred = out[:, :Ccls].reshape(N, H * W * num_anchors, 2)
    reg_pred = out[:, Ccls:Chead].reshape(N, H * W * num_anchors, 4)
    return cls_pred, reg_pred


def make_params(key, in_channels, mid_channels, num_anchors):
    """Deterministic synthetic parameters (channels-last weight layout)."""
    k = jax.random.split(key, 6)
    s = 0.05
    wconv = s * jax.random.normal(k[0], (3, 3, in_channels, mid_channels), jnp.float32)
    bconv = s * jax.random.normal(k[1], (1, mid_channels), jnp.float32)
    wcls = s * jax.random.normal(k[2], (mid_channels, num_anchors * 2), jnp.float32)
    bcls = s * jax.random.normal(k[3], (1, num_anchors * 2), jnp.float32)
    wreg = s * jax.random.normal(k[4], (mid_channels, num_anchors * 4), jnp.float32)
    breg = s * jax.random.normal(k[5], (1, num_anchors * 4), jnp.float32)
    return wconv, bconv, wcls, bcls, wreg, breg


def rpn_reference(x_nchw, params, *, num_anchors=9):
    """Pure-JAX f32 reference for correctness checking."""
    wconv, bconv, wcls, bcls, wreg, breg = params
    N, Cin, H, W = x_nchw.shape
    x_nhwc = jnp.transpose(x_nchw, (0, 2, 3, 1))
    h = jax.lax.conv_general_dilated(
        x_nhwc, wconv, window_strides=(1, 1), padding="SAME",
        dimension_numbers=("NHWC", "HWIO", "NHWC"))
    h = jax.nn.relu(h + bconv[0])
    cls = jnp.einsum("nhwc,cd->nhwd", h, wcls) + bcls[0]
    reg = jnp.einsum("nhwc,cd->nhwd", h, wreg) + breg[0]
    return (cls.reshape(N, H * W * num_anchors, 2),
            reg.reshape(N, H * W * num_anchors, 4))


if __name__ == "__main__":
    # Small shapes: batch=2, in_channels=4, 16x16 feature map, mid_channels=32.
    # (Note: at Cmid=32 the MXU runs at low lane utilization; production Cmid
    # is 512, where the fused-head / im2col design is actually exercised.)
    N, Cin, H, W = 2, 4, 16, 16
    Cmid, A = 32, 9

    key = jax.random.PRNGKey(0)
    kx, kp = jax.random.split(key)
    x = jax.random.normal(kx, (N, Cin, H, W), jnp.float32)
    params = make_params(kp, Cin, Cmid, A)

    fwd = jax.jit(functools.partial(rpn_forward, num_anchors=A))
    cls_pred, reg_pred = fwd(x, params)
    cls_pred = jax.block_until_ready(cls_pred)
    reg_pred = jax.block_until_ready(reg_pred)

    assert cls_pred.shape == (N, H * W * A, 2)
    assert reg_pred.shape == (N, H * W * A, 4)

    # bf16 MXU operands and bf16 writeback (f32 accumulation) => slightly
    # looser tolerance vs the pure-f32 reference.
    cls_ref, reg_ref = rpn_reference(x, params, num_anchors=A)
    assert jnp.allclose(cls_pred, cls_ref, atol=2e-2, rtol=2e-2)
    assert jnp.allclose(reg_pred, reg_ref, atol=2e-2, rtol=2e-2)

    print("KERNEL_OK")
</pallas_src>

<mosaic_0001>
module attributes {stable_mosaic.version = 11 : i64} {
  func.func @_rpn_kernel(%arg0: i32, %arg1: memref<256x36xbf16, #tpu.memory_space<vmem>>, %arg2: memref<36x32xbf16, #tpu.memory_space<vmem>>, %arg3: memref<1x32xf32, #tpu.memory_space<vmem>>, %arg4: memref<32x128xbf16, #tpu.memory_space<vmem>>, %arg5: memref<1x128xf32, #tpu.memory_space<vmem>>, %arg6: memref<256x128xbf16, #tpu.memory_space<vmem>>) attributes {dimension_semantics = [#tpu.dimension_semantics<parallel>], iteration_bounds = array<i64: 2>, scalar_prefetch = 0 : i64, scratch_operands = 0 : i64, tpu.core_type = #tpu.core_type<tc>, window_params = [{transform_indices = @transform_0, window_bounds = array<i64: 256, 36>}, {pipeline_mode = #tpu.pipeline_mode<synchronous>, transform_indices = @transform_1, window_bounds = array<i64: 36, 32>}, {pipeline_mode = #tpu.pipeline_mode<synchronous>, transform_indices = @transform_2, window_bounds = array<i64: 1, 32>}, {pipeline_mode = #tpu.pipeline_mode<synchronous>, transform_indices = @transform_3, window_bounds = array<i64: 32, 128>}, {pipeline_mode = #tpu.pipeline_mode<synchronous>, transform_indices = @transform_4, window_bounds = array<i64: 1, 128>}, {transform_indices = @transform_5, window_bounds = array<i64: 256, 128>}]} {
    %c0 = arith.constant 0 : index
    %c0_0 = arith.constant 0 : index
    %0 = vector.load %arg1[%c0, %c0_0] : memref<256x36xbf16, #tpu.memory_space<vmem>>, vector<256x36xbf16>
    %c0_1 = arith.constant 0 : index
    %c0_2 = arith.constant 0 : index
    %1 = vector.load %arg2[%c0_1, %c0_2] : memref<36x32xbf16, #tpu.memory_space<vmem>>, vector<36x32xbf16>
    %cst = arith.constant dense<0.000000e+00> : vector<256x32xf32>
    %2 = tpu.matmul %0, %1, %cst {dimension_numbers = #tpu.dot_dimension_numbers<[1], [0], [0], [1], [0, 0, 1, 1], [], []>} : vector<256x36xbf16>, vector<36x32xbf16>, vector<256x32xf32> -> vector<256x32xf32>
    %c0_3 = arith.constant 0 : index
    %c0_4 = arith.constant 0 : index
    %3 = vector.load %arg3[%c0_3, %c0_4] : memref<1x32xf32, #tpu.memory_space<vmem>>, vector<1x32xf32>
    %4 = vector.broadcast %3 : vector<1x32xf32> to vector<256x32xf32>
    %5 = arith.addf %2, %4 : vector<256x32xf32>
    %cst_5 = arith.constant 0.000000e+00 : f32
    %6 = vector.broadcast %cst_5 : f32 to vector<256x32xf32>
    %7 = arith.maximumf %5, %6 : vector<256x32xf32>
    %8 = arith.truncf %7 : vector<256x32xf32> to vector<256x32xbf16>
    %c0_6 = arith.constant 0 : index
    %c0_7 = arith.constant 0 : index
    %9 = vector.load %arg4[%c0_6, %c0_7] : memref<32x128xbf16, #tpu.memory_space<vmem>>, vector<32x128xbf16>
    %cst_8 = arith.constant dense<0.000000e+00> : vector<256x128xf32>
    %10 = tpu.matmul %8, %9, %cst_8 {dimension_numbers = #tpu.dot_dimension_numbers<[1], [0], [0], [1], [0, 0, 1, 1], [], []>} : vector<256x32xbf16>, vector<32x128xbf16>, vector<256x128xf32> -> vector<256x128xf32>
    %c0_9 = arith.constant 0 : index
    %c0_10 = arith.constant 0 : index
    %11 = vector.load %arg5[%c0_9, %c0_10] : memref<1x128xf32, #tpu.memory_space<vmem>>, vector<1x128xf32>
    %12 = vector.broadcast %11 : vector<1x128xf32> to vector<256x128xf32>
    %13 = arith.addf %10, %12 : vector<256x128xf32>
    %14 = arith.truncf %13 : vector<256x128xf32> to vector<256x128xbf16>
    %c0_11 = arith.constant 0 : index
    %c0_12 = arith.constant 0 : index
    %15 = vector.load %arg6[%c0_11, %c0_12] : memref<256x128xbf16, #tpu.memory_space<vmem>>, vector<256x128xbf16>
    tpu.vector_store %arg6[%c0_11, %c0_12], %14 {strides = array<i32>} : memref<256x128xbf16, #tpu.memory_space<vmem>>, vector<256x128xbf16>,
    return
  }
  func.func @transform_0(%arg0: i32) -> (i32, i32) {
    %c0_i32 = arith.constant 0 : i32
    %c0_i32_0 = arith.constant 0 : i32
    return %arg0, %c0_i32 : i32, i32
  }
  func.func @transform_1(%arg0: i32) -> (i32, i32) {
    %c0_i32 = arith.constant 0 : i32
    %c0_i32_0 = arith.constant 0 : i32
    %c0_i32_1 = arith.constant 0 : i32
    return %c0_i32, %c0_i32_0 : i32, i32
  }
  func.func @transform_2(%arg0: i32) -> (i32, i32) {
    %c0_i32 = arith.constant 0 : i32
    %c0_i32_0 = arith.constant 0 : i32
    %c0_i32_1 = arith.constant 0 : i32
    return %c0_i32, %c0_i32_0 : i32, i32
  }
  func.func @transform_3(%arg0: i32) -> (i32, i32) {
    %c0_i32 = arith.constant 0 : i32
    %c0_i32_0 = arith.constant 0 : i32
    %c0_i32_1 = arith.constant 0 : i32
    return %c0_i32, %c0_i32_0 : i32, i32
  }
  func.func @transform_4(%arg0: i32) -> (i32, i32) {
    %c0_i32 = arith.constant 0 : i32
    %c0_i32_0 = arith.constant 0 : i32
    %c0_i32_1 = arith.constant 0 : i32
    return %c0_i32, %c0_i32_0 : i32, i32
  }
  func.func @transform_5(%arg0: i32) -> (i32, i32) {
    %c0_i32 = arith.constant 0 : i32
    %c0_i32_0 = arith.constant 0 : i32
    return %arg0, %c0_i32 : i32, i32
  }
}

</mosaic_0001>

<llo_original>
// kernel: rpn_forward.1
$region0: #{rpn_forward.1}
  #allocation0 [shape = 'u32[]', space=smem, size = 0x4, offset = 0x4, fixed_abs, tag = 'smem constant byte address 0x4 - core index']
  #allocation1 [shape = 'u32[144,128]{1,0:T(1,128)}', space=vmem, size = 0x12000, scoped, tag = 'internal scratch']
  %s0 = inlined_call_operand.vmem [shape: bf16[512,36], index: 0, kind: input, shape index: {}]
  %s1 = inlined_call_operand.vmem [shape: bf16[36,32], index: 1, kind: input, shape index: {}]
  %s2 = inlined_call_operand.hbm [shape: f32[1,32], index: 2, kind: input, shape index: {}]
  %s3 = inlined_call_operand.vmem [shape: bf16[32,128], index: 3, kind: input, shape index: {}]
  %s4 = inlined_call_operand.vmem [shape: f32[1,128], index: 4, kind: input, shape index: {}]
  %s5 = inlined_call_operand.vmem [shape: bf16[512,128], index: 5, kind: output, shape index: {}]
  %s6 = sld [smem:[#allocation0]]
  $region57: #{rpn_forward.1} parent=0
    _
  %s8 = ssub.s32 1, %s6
  %s9 = scalar_select 0, %s8, %s6
  $region1: #{rpn_forward.1} parent=0
    #allocation2 [shape = 'u8[512]{0}', space=vmem, size = 0x400, scoped, tag = 'input window, operand 2, single buffered']
    #allocation3 [shape = 's32[2]{0}', space=sflag, size = 0x8, scoped, tag = 'scoped memory for rpn_forward.1']
    %10 = vsyncpa [#allocation3], 0
    loop: start=0, step=1, limit=4
    $region2: #{rpn_forward.1} parent=1 // loop_pre_header
      _
    $region3: #{rpn_forward.1} parent=1 // loop_header
      %s12 = sphi 0, %s16
      %p13 = scmp.ge.s32.totalorder %s12, 4
      %s22 = sphi 0, %s24
      %s25 = sphi 0, %s22
      %s26 = sphi 0, %s25
      %s42 = sphi 0, %s26
      %s46 = sphi 0, %s46
      %s48 = sphi 0, %s46
      %s49 = sphi 0, %s48
      %s63 = sphi 0, %s49
      %s67 = sphi 0, %s67
      %s69 = sphi 0, %s67
      %s70 = sphi 0, %s69
      %s84 = sphi 0, %s70
      %s88 = sphi 0, %s88
      %s90 = sphi 0, %s88
      %s91 = sphi 0, %s90
      %s105 = sphi 0, %s91
      %s109 = sphi 0, %s109
      %s111 = sphi 0, %s109
      %s112 = sphi 0, %s111
      %s126 = sphi 0, %s112
      %s132 = sphi 0, %s134
      %s135 = sphi 0, %s132
      %s136 = sphi 0, %s135
      %s152 = sphi 0, %s136
    $region4: #{rpn_forward.1} parent=1 // loop_header_branch
      %15 = sbr.rel (%p13) target = $region8
    $region5: #{rpn_forward.1} parent=1 // loop_body
      %s17 = ssub.s32 %s12, 1
      %s18 = ssub.s32 %s12, 2
      %s19 = sadd.s32 %s12, 1
      %s20 = ssub.s32 %s12, %s19
      %p21 = scmp.eq.s32.totalorder %s20, 0
      %s23 = sadd.s32 %s22, 1
      %s24 = scalar_select %p21, %s22, %s23
      %p27 = pneg %p21
      %p28 = scmp.eq.s32.totalorder %s12, 1
      %p29 = por %p27, %p28
      %p30 = scmp.ne.s32.totalorder %s22, %s25
      %p31 = scmp.eq.s32.totalorder %s12, 0
      %p32 = por %p30, %p31
      %p33 = scmp.ne.s32.totalorder %s22, %s25
      %p34 = scmp.eq.s32.totalorder %s17, 1
      %p35 = por %p33, %p34
      %p36 = scmp.ne.s32.totalorder %s25, %s26
      %p37 = scmp.eq.s32.totalorder %s17, 0
      %p38 = por %p36, %p37
      %p39 = scmp.ne.s32.totalorder %s25, %s26
      %p40 = scmp.eq.s32.totalorder %s18, 1
      %p41 = por %p39, %p40
      %p43 = scmp.ne.s32.totalorder %s26, %s42
      %p44 = scmp.eq.s32.totalorder %s18, 0
      %p45 = por %p43, %p44
      %s47 = sadd.s32 %s46, 1
      %p50 = scmp.eq.s32.totalorder %s12, 1
      %p51 = scmp.ne.s32.totalorder %s46, %s48
      %p52 = scmp.eq.s32.totalorder %s12, 0
      %p53 = por %p51, %p52
      %p54 = scmp.ne.s32.totalorder %s46, %s48
      %p55 = scmp.eq.s32.totalorder %s17, 1
      %p56 = por %p54, %p55
      %p57 = scmp.ne.s32.totalorder %s48, %s49
      %p58 = scmp.eq.s32.totalorder %s17, 0
      %p59 = por %p57, %p58
      %p60 = scmp.ne.s32.totalorder %s48, %s49
      %p61 = scmp.eq.s32.totalorder %s18, 1
      %p62 = por %p60, %p61
      %p64 = scmp.ne.s32.totalorder %s49, %s63
      %p65 = scmp.eq.s32.totalorder %s18, 0
      %p66 = por %p64, %p65
      %s68 = sadd.s32 %s67, 1
      %p71 = scmp.eq.s32.totalorder %s12, 1
      %p72 = scmp.ne.s32.totalorder %s67, %s69
      %p73 = scmp.eq.s32.totalorder %s12, 0
      %p74 = por %p72, %p73
      %p75 = scmp.ne.s32.totalorder %s67, %s69
      %p76 = scmp.eq.s32.totalorder %s17, 1
      %p77 = por %p75, %p76
      %p78 = scmp.ne.s32.totalorder %s69, %s70
      %p79 = scmp.eq.s32.totalorder %s17, 0
      %p80 = por %p78, %p79
      %p81 = scmp.ne.s32.totalorder %s69, %s70
      %p82 = scmp.eq.s32.totalorder %s18, 1
      %p83 = por %p81, %p82
      %p85 = scmp.ne.s32.totalorder %s70, %s84
      %p86 = scmp.eq.s32.totalorder %s18, 0
      %p87 = por %p85, %p86
      %s89 = sadd.s32 %s88, 1
      %p92 = scmp.eq.s32.totalorder %s12, 1
      %p93 = scmp.ne.s32.totalorder %s88, %s90
      %p94 = scmp.eq.s32.totalorder %s12, 0
      %p95 = por %p93, %p94
      %p96 = scmp.ne.s32.totalorder %s88, %s90
      %p97 = scmp.eq.s32.totalorder %s17, 1
      %p98 = por %p96, %p97
      %p99 = scmp.ne.s32.totalorder %s90, %s91
      %p100 = scmp.eq.s32.totalorder %s17, 0
      %p101 = por %p99, %p100
      %p102 = scmp.ne.s32.totalorder %s90, %s91
      %p103 = scmp.eq.s32.totalorder %s18, 1
      %p104 = por %p102, %p103
      %p106 = scmp.ne.s32.totalorder %s91, %s105
      %p107 = scmp.eq.s32.totalorder %s18, 0
      %p108 = por %p106, %p107
      %s110 = sadd.s32 %s109, 1
      %p113 = scmp.eq.s32.totalorder %s12, 1
      %p114 = scmp.ne.s32.totalorder %s109, %s111
      %p115 = scmp.eq.s32.totalorder %s12, 0
      %p116 = por %p114, %p115
      %p117 = scmp.ne.s32.totalorder %s109, %s111
      %p118 = scmp.eq.s32.totalorder %s17, 1
      %p119 = por %p117, %p118
      %p120 = scmp.ne.s32.totalorder %s111, %s112
      %p121 = scmp.eq.s32.totalorder %s17, 0
      %p122 = por %p120, %p121
      %p123 = scmp.ne.s32.totalorder %s111, %s112
      %p124 = scmp.eq.s32.totalorder %s18, 1
      %p125 = por %p123, %p124
      %p127 = scmp.ne.s32.totalorder %s112, %s126
      %p128 = scmp.eq.s32.totalorder %s18, 0
      %p129 = por %p127, %p128
      %s130 = ssub.s32 %s12, %s19
      %p131 = scmp.eq.s32.totalorder %s130, 0
      %s133 = sadd.s32 %s132, 1
      %s134 = scalar_select %p131, %s132, %s133
      %p137 = pneg %p131
      %p138 = scmp.eq.s32.totalorder %s12, 1
      %p139 = por %p137, %p138
      %p140 = scmp.ne.s32.totalorder %s132, %s135
      %p141 = scmp.eq.s32.totalorder %s12, 0
      %p142 = por %p140, %p141
      %p143 = scmp.ne.s32.totalorder %s132, %s135
      %p144 = scmp.eq.s32.totalorder %s17, 1
      %p145 = por %p143, %p144
      %p146 = scmp.ne.s32.totalorder %s135, %s136
      %p147 = scmp.eq.s32.totalorder %s17, 0
      %p148 = por %p146, %p147
      %p149 = scmp.ne.s32.totalorder %s135, %s136
      %p150 = scmp.eq.s32.totalorder %s18, 1
      %p151 = por %p149, %p150
      %p153 = scmp.ne.s32.totalorder %s136, %s152
      %p154 = scmp.eq.s32.totalorder %s18, 0
      %p155 = por %p153, %p154
      %p156 = scmp.le.s32.totalorder 1, %s12
      %p157 = scmp.lt.s32.totalorder %s12, 3
      %p158 = pnand %p156, %p157
      %p159 = pneg %p158
      // Predicated region
      $region9: #{rpn_forward.1} parent=5 // pred_check
        _
      $region10: #{rpn_forward.1} parent=5 // pred_check_branch
        %161 = sbr.rel (%p158) target = $region12
      $region11: #{rpn_forward.1} parent=5 // pred_region
        %s162 = ssub.s32 %s12, 1
        // Predicated region
        $region13: #{rpn_forward.1} parent=11 // pred_check
          %p163 = pneg %p59
        $region14: #{rpn_forward.1} parent=11 // pred_check_branch
          %165 = sbr.rel (%p163) target = $region16
        $region15: #{rpn_forward.1} parent=11 // pred_region
          _
        $region16: #{rpn_forward.1} parent=11 // pred_fallthru
          _
        // Predicated region
        $region17: #{rpn_forward.1} parent=11 // pred_check
          %p166 = pneg %p80
        $region18: #{rpn_forward.1} parent=11 // pred_check_branch
          %168 = sbr.rel (%p166) target = $region20
        $region19: #{rpn_forward.1} parent=11 // pred_region
          %s170 = ssub.s32 16, 16
          %171 = vsyncadd [#allocation3], %s170
          %s173 = sshll.u32 [#allocation2], 4
          %s174 = int_to_ptr.vmem [resolvable:$true] %s173
          %176 = dma.hbm_to_vmem [thread:$0]  %s2, 16, %s174, [#allocation3]
        $region20: #{rpn_forward.1} parent=11 // pred_fallthru
          _
        // Predicated region
        $region21: #{rpn_forward.1} parent=11 // pred_check
          %p177 = pneg %p101
        $region22: #{rpn_forward.1} parent=11 // pred_check_branch
          %179 = sbr.rel (%p177) target = $region24
        $region23: #{rpn_forward.1} parent=11 // pred_region
          _
        $region24: #{rpn_forward.1} parent=11 // pred_fallthru
          _
        // Predicated region
        $region25: #{rpn_forward.1} parent=11 // pred_check
          %p180 = pneg %p122
        $region26: #{rpn_forward.1} parent=11 // pred_check_branch
          %182 = sbr.rel (%p180) target = $region28
        $region27: #{rpn_forward.1} parent=11 // pred_region
          _
        $region28: #{rpn_forward.1} parent=11 // pred_fallthru
          _
      $region12: #{rpn_forward.1} parent=5 // pred_fallthru
        _
      %p183 = scmp.lt.s32.totalorder %s12, 2
      // Predicated region
      $region29: #{rpn_forward.1} parent=5 // pred_check
        %p184 = pneg %p183
      $region30: #{rpn_forward.1} parent=5 // pred_check_branch
        %186 = sbr.rel (%p184) target = $region32
      $region31: #{rpn_forward.1} parent=5 // pred_region
        // Predicated region
        $region33: #{rpn_forward.1} parent=31 // pred_check
          %p187 = pneg %p32
        $region34: #{rpn_forward.1} parent=31 // pred_check_branch
          %189 = sbr.rel (%p187) target = $region36
        $region35: #{rpn_forward.1} parent=31 // pred_region
          %s190 = smul.u32 32, %s12
          %p191 = scmp.lt.s32.totalorder %s190, 63
          %s192 = scalar_select %p191, %s190, 63
          %s193 = smul.addr %s192, 4
          %s194 = scalar_lea.vmem %s0, %s193
          %s195 = smul.u32 32, %s12
        $region36: #{rpn_forward.1} parent=31 // pred_fallthru
          _
      $region32: #{rpn_forward.1} parent=5 // pred_fallthru
        _
      %p196 = scmp.le.s32.totalorder 1, %s12
      %p197 = scmp.lt.s32.totalorder %s12, 3
      %p198 = pnand %p196, %p197
      %p199 = pneg %p198
      // Predicated region
      $region37: #{rpn_forward.1} parent=5 // pred_check
        _
      $region38: #{rpn_forward.1} parent=5 // pred_check_branch
        %201 = sbr.rel (%p198) target = $region40
      $region39: #{rpn_forward.1} parent=5 // pred_region
        %s202 = ssub.s32 %s12, 1
        // Predicated region
        $region41: #{rpn_forward.1} parent=39 // pred_check
          %p203 = pneg %p80
        $region42: #{rpn_forward.1} parent=39 // pred_check_branch
          %205 = sbr.rel (%p203) target = $region44
        $region43: #{rpn_forward.1} parent=39 // pred_region
          %206 = dma.done [#allocation3], 16
        $region44: #{rpn_forward.1} parent=39 // pred_fallthru
          _
        %s207 = smul.u32 32, %s17
        %p208 = scmp.lt.s32.totalorder %s207, 63
        %s209 = scalar_select %p208, %s207, 63
        %s210 = smul.addr %s209, 4
        %s211 = scalar_lea.vmem %s0, %s210
        %p212 = pneg %p38
        %p213 = pneg %p35
        %p214 = pneg %p59
        %p215 = pneg %p56
        %p216 = pneg %p80
        %p217 = pneg %p77
        %p218 = pneg %p101
        %p219 = pneg %p98
        %p220 = pneg %p122
        %p221 = pneg %p119
        %p222 = pneg %p148
        %p223 = pneg %p145
        %s224 = smul.u32 32, %s17
        %p225 = scmp.lt.s32.totalorder %s224, 63
        %s226 = scalar_select %p225, %s224, 63
        %s227 = smul.addr %s226, 4
        %s228 = scalar_lea.vmem %s5, %s227
        %s229 = smul.u32 32, %s17
        %p230 = scmp.lt.s32.totalorder %s229, 63
        %s231 = scalar_select %p230, %s229, 63
        %s232 = smul.addr %s231, 4
        %s233 = scalar_lea.vmem %s0, %s232
        %s234 = smul.u32 32, %s17
        %s235 = smul.u32 32, %s17
        %p236 = scmp.lt.s32.totalorder %s235, 63
        %s237 = scalar_select %p236, %s235, 63
        %s238 = smul.addr %s237, 4
        %s239 = scalar_lea.vmem %s5, %s238
        %s240 = smul.u32 32, %s17
        %v242 = vld [vmem:[%s233] sm:$0xf]
        %v243 = vld [vmem:[%s233 + $0x4] sm:$0xf]
        %v244 = vld [vmem:[%s233 + $0x8] sm:$0xf]
        %v245 = vld [vmem:[%s233 + $0xc] sm:$0xf]
        %v246 = vld [vmem:[%s233 + $0x10] sm:$0xf]
        %v247 = vld [vmem:[%s233 + $0x14] sm:$0xf]
        %v248 = vld [vmem:[%s233 + $0x18] sm:$0xf]
        %v249 = vld [vmem:[%s233 + $0x1c] sm:$0xf]
        %v250 = vld [vmem:[%s233 + $0x20] sm:$0xf]
        %v251 = vld [vmem:[%s233 + $0x24] sm:$0xf]
        %v252 = vld [vmem:[%s233 + $0x28] sm:$0xf]
        %v253 = vld [vmem:[%s233 + $0x2c] sm:$0xf]
        %v254 = vld [vmem:[%s233 + $0x30] sm:$0xf]
        %v255 = vld [vmem:[%s233 + $0x34] sm:$0xf]
        %v256 = vld [vmem:[%s233 + $0x38] sm:$0xf]
        %v257 = vld [vmem:[%s233 + $0x3c] sm:$0xf]
        %v258 = vld [vmem:[%s233 + $0x40] sm:$0xf]
        %v259 = vld [vmem:[%s233 + $0x44] sm:$0xf]
        %v260 = vld [vmem:[%s233 + $0x48] sm:$0xf]
        %v261 = vld [vmem:[%s233 + $0x4c] sm:$0xf]
        %v262 = vld [vmem:[%s233 + $0x50] sm:$0xf]
        %v263 = vld [vmem:[%s233 + $0x54] sm:$0xf]
        %v264 = vld [vmem:[%s233 + $0x58] sm:$0xf]
        %v265 = vld [vmem:[%s233 + $0x5c] sm:$0xf]
        %v266 = vld [vmem:[%s233 + $0x60] sm:$0xf]
        %v267 = vld [vmem:[%s233 + $0x64] sm:$0xf]
        %v268 = vld [vmem:[%s233 + $0x68] sm:$0xf]
        %v269 = vld [vmem:[%s233 + $0x6c] sm:$0xf]
        %v270 = vld [vmem:[%s233 + $0x70] sm:$0xf]
        %v271 = vld [vmem:[%s233 + $0x74] sm:$0xf]
        %v272 = vld [vmem:[%s233 + $0x78] sm:$0xf]
        %v273 = vld [vmem:[%s233 + $0x7c] sm:$0xf]
        %v274 = vld [vmem:[%s1] sm:$0xf]
        %v275 = vld [vmem:[%s1 + $0x4] sm:$0xf]
        %v276 = vld [vmem:[%s1 + $0x8] sm:$0xf]
        %v277 = vld [vmem:[%s1 + $0xc] sm:$0xf]
        %v278 = vld [vmem:[%s1 + $0x10] sm:$0x3]
        %v279 = vld [vmem:[#allocation2] sm:$0x1]
        %v281 = vlaneseq
        %v282 = vshrl.u32 %v281, 7
        %v283 = vsub.s32 0, %v282
        %v284 = vrot.slane %v279, %v283
        %v318 = vunpack.c.l.b16 %v242
        %v319 = vunpack.c.l.b16 %v243
        %v320 = vunpack.c.l.b16 %v244
        %v321 = vunpack.c.l.b16 %v245
        %v322 = vunpack.c.l.b16 %v246
        %v323 = vunpack.c.l.b16 %v247
        %v324 = vunpack.c.l.b16 %v248
        %v325 = vunpack.c.l.b16 %v249
        %v326 = vunpack.c.l.b16 %v250
        %v327 = vunpack.c.l.b16 %v251
        %v328 = vunpack.c.l.b16 %v252
        %v329 = vunpack.c.l.b16 %v253
        %v330 = vunpack.c.l.b16 %v254
        %v331 = vunpack.c.l.b16 %v255
        %v332 = vunpack.c.l.b16 %v256
        %v333 = vunpack.c.l.b16 %v257
        %v334 = vunpack.c.l.b16 %v258
        %v335 = vunpack.c.l.b16 %v259
        %v336 = vunpack.c.l.b16 %v260
        %v337 = vunpack.c.l.b16 %v261
        %v338 = vunpack.c.l.b16 %v262
        %v339 = vunpack.c.l.b16 %v263
        %v340 = vunpack.c.l.b16 %v264
        %v341 = vunpack.c.l.b16 %v265
        %v342 = vunpack.c.l.b16 %v266
        %v343 = vunpack.c.l.b16 %v267
        %v344 = vunpack.c.l.b16 %v268
        %v345 = vunpack.c.l.b16 %v269
        %v346 = vunpack.c.l.b16 %v270
        %v347 = vunpack.c.l.b16 %v271
        %v348 = vunpack.c.l.b16 %v272
        %v349 = vunpack.c.l.b16 %v273
        %v350 = vpack.c.b16 %v319, %v318
        %v351 = vpack.c.b16 %v321, %v320
        %v352 = vpack.c.b16 %v323, %v322
        %v353 = vpack.c.b16 %v325, %v324
        %v354 = vpack.c.b16 %v327, %v326
        %v355 = vpack.c.b16 %v329, %v328
        %v356 = vpack.c.b16 %v331, %v330
        %v357 = vpack.c.b16 %v333, %v332
        %v358 = vpack.c.b16 %v335, %v334
        %v359 = vpack.c.b16 %v337, %v336
        %v360 = vpack.c.b16 %v339, %v338
        %v361 = vpack.c.b16 %v341, %v340
        %v362 = vpack.c.b16 %v343, %v342
        %v363 = vpack.c.b16 %v345, %v344
        %v364 = vpack.c.b16 %v347, %v346
        %v365 = vpack.c.b16 %v349, %v348
        %v371 = vunpack.c.l.b16 %v274
        %v372 = vunpack.c.l.b16 %v275
        %v373 = vunpack.c.l.b16 %v276
        %v374 = vunpack.c.l.b16 %v277
        %v375 = vunpack.c.l.b16 %v278
        %v376 = vpack.c.b16 %v372, %v371
        %v377 = vpack.c.b16 %v374, %v373
        %v378 = vpack.c.b16 %v375, %v375
        %vm381 = vcmask 293888
        %v383 = vsel %vm381, %v350, 0
        %v386 = vsel %vm381, %v351, 0
        %v389 = vsel %vm381, %v352, 0
        %v392 = vsel %vm381, %v353, 0
        %v395 = vsel %vm381, %v354, 0
        %v398 = vsel %vm381, %v355, 0
        %v401 = vsel %vm381, %v356, 0
        %v404 = vsel %vm381, %v357, 0
        %v407 = vsel %vm381, %v358, 0
        %v410 = vsel %vm381, %v359, 0
        %v413 = vsel %vm381, %v360, 0
        %v416 = vsel %vm381, %v361, 0
        %v419 = vsel %vm381, %v362, 0
        %v422 = vsel %vm381, %v363, 0
        %v425 = vsel %vm381, %v364, 0
        %v428 = vsel %vm381, %v365, 0
        %vm430 = vcmask 1041408
        %v432 = vsel %vm430, %v378, 0
        %434 = vmatprep.subr.bf16.mxu0 0
        %435 = vmatpush1.bf16.msra.mxu0 %v376
        %436 = vmatprep.subr.bf16.mxu0 0
        %437 = vmatpush1.bf16.msra.mxu0 %v377
        %438 = vmatprep.subr.bf16.mxu0 0
        %439 = vmatpush1.bf16.msra.mxu0 %v432
        %440 = vmatprep.subr.bf16.mxu0 0
        %441 = vmatpush1.bf16.msra.mxu0 0
        %442 = vmatprep.subr.bf16.mxu0 0
        %443 = vmatpush1.bf16.msra.mxu0 0
        %444 = vmatprep.subr.bf16.mxu0 0
        %445 = vmatpush1.bf16.msra.mxu0 0
        %446 = vmatprep.subr.bf16.mxu0 0
        %447 = vmatpush1.bf16.msra.mxu0 0
        %448 = vmatprep.subr.bf16.mxu0 0
        %449 = vmatpush1.bf16.msra.mxu0 0
        %450 = vmatprep.subr.bf16.mxu0 0
        %451 = vmatpush1.bf16.msra.mxu0 0
        %452 = vmatprep.subr.bf16.mxu0 0
        %453 = vmatpush1.bf16.msra.mxu0 0
        %454 = vmatprep.subr.bf16.mxu0 0
        %455 = vmatpush1.bf16.msra.mxu0 0
        %456 = vmatprep.subr.bf16.mxu0 0
        %457 = vmatpush1.bf16.msra.mxu0 0
        %458 = vmatprep.subr.bf16.mxu0 0
        %459 = vmatpush1.bf16.msra.mxu0 0
        %460 = vmatprep.subr.bf16.mxu0 0
        %461 = vmatpush1.bf16.msra.mxu0 0
        %462 = vmatprep.subr.bf16.mxu0 0
        %463 = vmatpush1.bf16.msra.mxu0 0
        %464 = vmatprep.subr.bf16.mxu0 0
        %465 = vmatpush1.bf16.msra.mxu0 0
        %466 = vmatprep.mubr.bf16.mxu0 0
        %467 = vmatmul.mubr.bf16.gmra.mrb[0].mxu0 %v383
        %v468 = vpop.f32.mrb[0].mxu0
        %v469 = vadd.f32 %v284, %v468
        %v470 = vpop.f32.mrb[0].mxu0
        %v471 = vpop.f32.mrb[0].mxu0
        %v472 = vadd.f32 %v284, %v471
        %v473 = vpop.f32.mrb[0].mxu0
        %474 = vmatprep.mubr.bf16.mxu0 0
        %475 = vmatmul.mubr.bf16.gmra.mrb[0].mxu0 %v386
        %v476 = vpop.f32.mrb[0].mxu0
        %v477 = vadd.f32 %v284, %v476
        %v478 = vpop.f32.mrb[0].mxu0
        %v479 = vpop.f32.mrb[0].mxu0
        %v480 = vadd.f32 %v284, %v479
        %v481 = vpop.f32.mrb[0].mxu0
        %482 = vmatprep.mubr.bf16.mxu0 0
        %483 = vmatmul.mubr.bf16.gmra.mrb[0].mxu0 %v389
        %v484 = vpop.f32.mrb[0].mxu0
        %v485 = vadd.f32 %v284, %v484
        %v486 = vpop.f32.mrb[0].mxu0
        %v487 = vpop.f32.mrb[0].mxu0
        %v488 = vadd.f32 %v284, %v487
        %v489 = vpop.f32.mrb[0].mxu0
        %490 = vmatprep.mubr.bf16.mxu0 0
        %491 = vmatmul.mubr.bf16.gmra.mrb[0].mxu0 %v392
        %v492 = vpop.f32.mrb[0].mxu0
        %v493 = vadd.f32 %v284, %v492
        %v494 = vpop.f32.mrb[0].mxu0
        %v495 = vpop.f32.mrb[0].mxu0
        %v496 = vadd.f32 %v284, %v495
        %v497 = vpop.f32.mrb[0].mxu0
        %498 = vmatprep.mubr.bf16.mxu0 0
        %499 = vmatmul.mubr.bf16.gmra.mrb[0].mxu0 %v395
        %v500 = vpop.f32.mrb[0].mxu0
        %v501 = vadd.f32 %v284, %v500
        %v502 = vpop.f32.mrb[0].mxu0
        %v503 = vpop.f32.mrb[0].mxu0
        %v504 = vadd.f32 %v284, %v503
        %v505 = vpop.f32.mrb[0].mxu0
        %506 = vmatprep.mubr.bf16.mxu0 0
        %507 = vmatmul.mubr.bf16.gmra.mrb[0].mxu0 %v398
        %v508 = vpop.f32.mrb[0].mxu0
        %v509 = vadd.f32 %v284, %v508
        %v510 = vpop.f32.mrb[0].mxu0
        %v511 = vpop.f32.mrb[0].mxu0
        %v512 = vadd.f32 %v284, %v511
        %v513 = vpop.f32.mrb[0].mxu0
        %514 = vmatprep.mubr.bf16.mxu0 0
        %515 = vmatmul.mubr.bf16.gmra.mrb[0].mxu0 %v401
        %v516 = vpop.f32.mrb[0].mxu0
        %v517 = vadd.f32 %v284, %v516
        %v518 = vpop.f32.mrb[0].mxu0
        %v519 = vpop.f32.mrb[0].mxu0
        %v520 = vadd.f32 %v284, %v519
        %v521 = vpop.f32.mrb[0].mxu0
        %522 = vmatprep.mubr.bf16.mxu0 0
        %523 = vmatmul.mubr.bf16.gmra.mrb[0].mxu0 %v404
        %v524 = vpop.f32.mrb[0].mxu0
        %v525 = vadd.f32 %v284, %v524
        %v526 = vpop.f32.mrb[0].mxu0
        %v527 = vpop.f32.mrb[0].mxu0
        %v528 = vadd.f32 %v284, %v527
        %v529 = vpop.f32.mrb[0].mxu0
        %530 = vmatprep.mubr.bf16.mxu0 0
        %531 = vmatmul.mubr.bf16.gmra.mrb[0].mxu0 %v407
        %v532 = vpop.f32.mrb[0].mxu0
        %v533 = vadd.f32 %v284, %v532
        %v534 = vpop.f32.mrb[0].mxu0
        %v535 = vpop.f32.mrb[0].mxu0
        %v536 = vadd.f32 %v284, %v535
        %v537 = vpop.f32.mrb[0].mxu0
        %538 = vmatprep.mubr.bf16.mxu0 0
        %539 = vmatmul.mubr.bf16.gmra.mrb[0].mxu0 %v410
        %v540 = vpop.f32.mrb[0].mxu0
        %v541 = vadd.f32 %v284, %v540
        %v542 = vpop.f32.mrb[0].mxu0
        %v543 = vpop.f32.mrb[0].mxu0
        %v544 = vadd.f32 %v284, %v543
        %v545 = vpop.f32.mrb[0].mxu0
        %546 = vmatprep.mubr.bf16.mxu0 0
        %547 = vmatmul.mubr.bf16.gmra.mrb[0].mxu0 %v413
        %v548 = vpop.f32.mrb[0].mxu0
        %v549 = vadd.f32 %v284, %v548
        %v550 = vpop.f32.mrb[0].mxu0
        %v551 = vpop.f32.mrb[0].mxu0
        %v552 = vadd.f32 %v284, %v551
        %v553 = vpop.f32.mrb[0].mxu0
        %554 = vmatprep.mubr.bf16.mxu0 0
        %555 = vmatmul.mubr.bf16.gmra.mrb[0].mxu0 %v416
        %v556 = vpop.f32.mrb[0].mxu0
        %v557 = vadd.f32 %v284, %v556
        %v558 = vpop.f32.mrb[0].mxu0
        %v559 = vpop.f32.mrb[0].mxu0
        %v560 = vadd.f32 %v284, %v559
        %v561 = vpop.f32.mrb[0].mxu0
        %562 = vmatprep.mubr.bf16.mxu0 0
        %563 = vmatmul.mubr.bf16.gmra.mrb[0].mxu0 %v419
        %v564 = vpop.f32.mrb[0].mxu0
        %v565 = vadd.f32 %v284, %v564
        %v566 = vpop.f32.mrb[0].mxu0
        %v567 = vpop.f32.mrb[0].mxu0
        %v568 = vadd.f32 %v284, %v567
        %v569 = vpop.f32.mrb[0].mxu0
        %570 = vmatprep.mubr.bf16.mxu0 0
        %571 = vmatmul.mubr.bf16.gmra.mrb[0].mxu0 %v422
        %v572 = vpop.f32.mrb[0].mxu0
        %v573 = vadd.f32 %v284, %v572
        %v574 = vpop.f32.mrb[0].mxu0
        %v575 = vpop.f32.mrb[0].mxu0
        %v576 = vadd.f32 %v284, %v575
        %v577 = vpop.f32.mrb[0].mxu0
        %578 = vmatprep.mubr.bf16.mxu0 0
        %579 = vmatmul.mubr.bf16.gmra.mrb[0].mxu0 %v425
        %v580 = vpop.f32.mrb[0].mxu0
        %v581 = vadd.f32 %v284, %v580
        %v582 = vpop.f32.mrb[0].mxu0
        %v583 = vpop.f32.mrb[0].mxu0
        %v584 = vadd.f32 %v284, %v583
        %v585 = vpop.f32.mrb[0].mxu0
        %586 = vmatprep.mubr.bf16.mxu0 0
        %587 = vmatmul.mubr.bf16.gmra.mrb[0].mxu0 %v428
        %v588 = vpop.f32.mrb[0].mxu0
        %v589 = vadd.f32 %v284, %v588
        %v590 = vpop.f32.mrb[0].mxu0
        %v591 = vpop.f32.mrb[0].mxu0
        %v592 = vadd.f32 %v284, %v591
        %v593 = vpop.f32.mrb[0].mxu0
        %594 = vdwg.mxu0
        %v595 = vmax.f32 %v469, 0.0
        %v596 = vmax.f32 %v472, 0.0
        %v597 = vmax.f32 %v477, 0.0
        %v598 = vmax.f32 %v480, 0.0
        %v599 = vmax.f32 %v485, 0.0
        %v600 = vmax.f32 %v488, 0.0
        %v601 = vmax.f32 %v493, 0.0
        %v602 = vmax.f32 %v496, 0.0
        %v603 = vmax.f32 %v501, 0.0
        %v604 = vmax.f32 %v504, 0.0
        %v605 = vmax.f32 %v509, 0.0
        %v606 = vmax.f32 %v512, 0.0
        %v607 = vmax.f32 %v517, 0.0
        %v608 = vmax.f32 %v520, 0.0
        %v609 = vmax.f32 %v525, 0.0
        %v610 = vmax.f32 %v528, 0.0
        %v611 = vmax.f32 %v533, 0.0
        %v612 = vmax.f32 %v536, 0.0
        %v613 = vmax.f32 %v541, 0.0
        %v614 = vmax.f32 %v544, 0.0
        %v615 = vmax.f32 %v549, 0.0
        %v616 = vmax.f32 %v552, 0.0
        %v617 = vmax.f32 %v557, 0.0
        %v618 = vmax.f32 %v560, 0.0
        %v619 = vmax.f32 %v565, 0.0
        %v620 = vmax.f32 %v568, 0.0
        %v621 = vmax.f32 %v573, 0.0
        %v622 = vmax.f32 %v576, 0.0
        %v623 = vmax.f32 %v581, 0.0
        %v624 = vmax.f32 %v584, 0.0
        %v625 = vmax.f32 %v589, 0.0
        %v626 = vmax.f32 %v592, 0.0
        %v627 = vpack.c.bf16 %v596, %v595
        %v628 = vpack.c.bf16 %v598, %v597
        %v629 = vpack.c.bf16 %v600, %v599
        %v630 = vpack.c.bf16 %v602, %v601
        %v631 = vpack.c.bf16 %v604, %v603
        %v632 = vpack.c.bf16 %v606, %v605
        %v633 = vpack.c.bf16 %v608, %v607
        %v634 = vpack.c.bf16 %v610, %v609
        %v635 = vpack.c.bf16 %v612, %v611
        %v636 = vpack.c.bf16 %v614, %v613
        %v637 = vpack.c.bf16 %v616, %v615
        %v638 = vpack.c.bf16 %v618, %v617
        %v639 = vpack.c.bf16 %v620, %v619
        %v640 = vpack.c.bf16 %v622, %v621
        %v641 = vpack.c.bf16 %v624, %v623
        %v642 = vpack.c.bf16 %v626, %v625
        %v643 = vld [vmem:[%s3] sm:$0xf]
        %v644 = vld [vmem:[%s3 + $0x4] sm:$0xf]
        %v645 = vld [vmem:[%s3 + $0x8] sm:$0xf]
        %v646 = vld [vmem:[%s3 + $0xc] sm:$0xf]
        %v647 = vld [vmem:[%s4] sm:$0x1]
        %v649 = vlaneseq
        %v650 = vshrl.u32 %v649, 7
        %v651 = vsub.s32 0, %v650
        %v652 = vrot.slane %v647, %v651
        %v658 = vunpack.c.l.b16 %v643
        %v659 = vunpack.c.l.b16 %v644
        %v660 = vunpack.c.l.b16 %v645
        %v661 = vunpack.c.l.b16 %v646
        %v662 = vpack.c.b16 %v659, %v658
        %v663 = vpack.c.b16 %v661, %v660
        %vm666 = vcmask 261120
        %v668 = vsel %vm666, %v627, 0
        %v671 = vsel %vm666, %v628, 0
        %v674 = vsel %vm666, %v629, 0
        %v677 = vsel %vm666, %v630, 0
        %v680 = vsel %vm666, %v631, 0
        %v683 = vsel %vm666, %v632, 0
        %v686 = vsel %vm666, %v633, 0
        %v689 = vsel %vm666, %v634, 0
        %v692 = vsel %vm666, %v635, 0
        %v695 = vsel %vm666, %v636, 0
        %v698 = vsel %vm666, %v637, 0
        %v701 = vsel %vm666, %v638, 0
        %v704 = vsel %vm666, %v639, 0
        %v707 = vsel %vm666, %v640, 0
        %v710 = vsel %vm666, %v641, 0
        %v713 = vsel %vm666, %v642, 0
        %715 = vmatprep.subr.bf16.mxu0 0
        %716 = vmatpush1.bf16.msra.mxu0 %v662
        %717 = vmatprep.subr.bf16.mxu0 0
        %718 = vmatpush1.bf16.msra.mxu0 %v663
        %719 = vmatprep.subr.bf16.mxu0 0
        %720 = vmatpush1.bf16.msra.mxu0 0
        %721 = vmatprep.subr.bf16.mxu0 0
        %722 = vmatpush1.bf16.msra.mxu0 0
        %723 = vmatprep.subr.bf16.mxu0 0
        %724 = vmatpush1.bf16.msra.mxu0 0
        %725 = vmatprep.subr.bf16.mxu0 0
        %726 = vmatpush1.bf16.msra.mxu0 0
        %727 = vmatprep.subr.bf16.mxu0 0
        %728 = vmatpush1.bf16.msra.mxu0 0
        %729 = vmatprep.subr.bf16.mxu0 0
        %730 = vmatpush1.bf16.msra.mxu0 0
        %731 = vmatprep.subr.bf16.mxu0 0
        %732 = vmatpush1.bf16.msra.mxu0 0
        %733 = vmatprep.subr.bf16.mxu0 0
        %734 = vmatpush1.bf16.msra.mxu0 0
        %735 = vmatprep.subr.bf16.mxu0 0
        %736 = vmatpush1.bf16.msra.mxu0 0
        %737 = vmatprep.subr.bf16.mxu0 0
        %738 = vmatpush1.bf16.msra.mxu0 0
        %739 = vmatprep.subr.bf16.mxu0 0
        %740 = vmatpush1.bf16.msra.mxu0 0
        %741 = vmatprep.subr.bf16.mxu0 0
        %742 = vmatpush1.bf16.msra.mxu0 0
        %743 = vmatprep.subr.bf16.mxu0 0
        %744 = vmatpush1.bf16.msra.mxu0 0
        %745 = vmatprep.subr.bf16.mxu0 0
        %746 = vmatpush1.bf16.msra.mxu0 0
        %747 = vmatprep.mubr.bf16.mxu0 0
        %748 = vmatmul.mubr.bf16.gmra.mrb[0].mxu0 %v668
        %v749 = vpop.f32.mrb[0].mxu0
        %v750 = vadd.f32 %v652, %v749
        %v751 = vpop.f32.mrb[0].mxu0
        %v752 = vpop.f32.mrb[0].mxu0
        %v753 = vadd.f32 %v652, %v752
        %v754 = vpop.f32.mrb[0].mxu0
        %755 = vmatprep.mubr.bf16.mxu0 0
        %756 = vmatmul.mubr.bf16.gmra.mrb[0].mxu0 %v671
        %v757 = vpop.f32.mrb[0].mxu0
        %v758 = vadd.f32 %v652, %v757
        %v759 = vpop.f32.mrb[0].mxu0
        %v760 = vpop.f32.mrb[0].mxu0
        %v761 = vadd.f32 %v652, %v760
        %v762 = vpop.f32.mrb[0].mxu0
        %763 = vmatprep.mubr.bf16.mxu0 0
        %764 = vmatmul.mubr.bf16.gmra.mrb[0].mxu0 %v674
        %v765 = vpop.f32.mrb[0].mxu0
        %v766 = vadd.f32 %v652, %v765
        %v767 = vpop.f32.mrb[0].mxu0
        %v768 = vpop.f32.mrb[0].mxu0
        %v769 = vadd.f32 %v652, %v768
        %v770 = vpop.f32.mrb[0].mxu0
        %771 = vmatprep.mubr.bf16.mxu0 0
        %772 = vmatmul.mubr.bf16.gmra.mrb[0].mxu0 %v677
        %v773 = vpop.f32.mrb[0].mxu0
        %v774 = vadd.f32 %v652, %v773
        %v775 = vpop.f32.mrb[0].mxu0
        %v776 = vpop.f32.mrb[0].mxu0
        %v777 = vadd.f32 %v652, %v776
        %v778 = vpop.f32.mrb[0].mxu0
        %779 = vmatprep.mubr.bf16.mxu0 0
        %780 = vmatmul.mubr.bf16.gmra.mrb[0].mxu0 %v680
        %v781 = vpop.f32.mrb[0].mxu0
        %v782 = vadd.f32 %v652, %v781
        %v783 = vpop.f32.mrb[0].mxu0
        %v784 = vpop.f32.mrb[0].mxu0
        %v785 = vadd.f32 %v652, %v784
        %v786 = vpop.f32.mrb[0].mxu0
        %787 = vmatprep.mubr.bf16.mxu0 0
        %788 = vmatmul.mubr.bf16.gmra.mrb[0].mxu0 %v683
        %v789 = vpop.f32.mrb[0].mxu0
        %v790 = vadd.f32 %v652, %v789
        %v791 = vpop.f32.mrb[0].mxu0
        %v792 = vpop.f32.mrb[0].mxu0
        %v793 = vadd.f32 %v652, %v792
        %v794 = vpop.f32.mrb[0].mxu0
        %795 = vmatprep.mubr.bf16.mxu0 0
        %796 = vmatmul.mubr.bf16.gmra.mrb[0].mxu0 %v686
        %v797 = vpop.f32.mrb[0].mxu0
        %v798 = vadd.f32 %v652, %v797
        %v799 = vpop.f32.mrb[0].mxu0
        %v800 = vpop.f32.mrb[0].mxu0
        %v801 = vadd.f32 %v652, %v800
        %v802 = vpop.f32.mrb[0].mxu0
        %803 = vmatprep.mubr.bf16.mxu0 0
        %804 = vmatmul.mubr.bf16.gmra.mrb[0].mxu0 %v689
        %v805 = vpop.f32.mrb[0].mxu0
        %v806 = vadd.f32 %v652, %v805
        %v807 = vpop.f32.mrb[0].mxu0
        %v808 = vpop.f32.mrb[0].mxu0
        %v809 = vadd.f32 %v652, %v808
        %v810 = vpop.f32.mrb[0].mxu0
        %811 = vmatprep.mubr.bf16.mxu0 0
        %812 = vmatmul.mubr.bf16.gmra.mrb[0].mxu0 %v692
        %v813 = vpop.f32.mrb[0].mxu0
        %v814 = vadd.f32 %v652, %v813
        %v815 = vpop.f32.mrb[0].mxu0
        %v816 = vpop.f32.mrb[0].mxu0
        %v817 = vadd.f32 %v652, %v816
        %v818 = vpop.f32.mrb[0].mxu0
        %819 = vmatprep.mubr.bf16.mxu0 0
        %820 = vmatmul.mubr.bf16.gmra.mrb[0].mxu0 %v695
        %v821 = vpop.f32.mrb[0].mxu0
        %v822 = vadd.f32 %v652, %v821
        %v823 = vpop.f32.mrb[0].mxu0
        %v824 = vpop.f32.mrb[0].mxu0
        %v825 = vadd.f32 %v652, %v824
        %v826 = vpop.f32.mrb[0].mxu0
        %827 = vmatprep.mubr.bf16.mxu0 0
        %828 = vmatmul.mubr.bf16.gmra.mrb[0].mxu0 %v698
        %v829 = vpop.f32.mrb[0].mxu0
        %v830 = vadd.f32 %v652, %v829
        %v831 = vpop.f32.mrb[0].mxu0
        %v832 = vpop.f32.mrb[0].mxu0
        %v833 = vadd.f32 %v652, %v832
        %v834 = vpop.f32.mrb[0].mxu0
        %835 = vmatprep.mubr.bf16.mxu0 0
        %836 = vmatmul.mubr.bf16.gmra.mrb[0].mxu0 %v701
        %v837 = vpop.f32.mrb[0].mxu0
        %v838 = vadd.f32 %v652, %v837
        %v839 = vpop.f32.mrb[0].mxu0
        %v840 = vpop.f32.mrb[0].mxu0
        %v841 = vadd.f32 %v652, %v840
        %v842 = vpop.f32.mrb[0].mxu0
        %843 = vmatprep.mubr.bf16.mxu0 0
        %844 = vmatmul.mubr.bf16.gmra.mrb[0].mxu0 %v704
        %v845 = vpop.f32.mrb[0].mxu0
        %v846 = vadd.f32 %v652, %v845
        %v847 = vpop.f32.mrb[0].mxu0
        %v848 = vpop.f32.mrb[0].mxu0
        %v849 = vadd.f32 %v652, %v848
        %v850 = vpop.f32.mrb[0].mxu0
        %851 = vmatprep.mubr.bf16.mxu0 0
        %852 = vmatmul.mubr.bf16.gmra.mrb[0].mxu0 %v707
        %v853 = vpop.f32.mrb[0].mxu0
        %v854 = vadd.f32 %v652, %v853
        %v855 = vpop.f32.mrb[0].mxu0
        %v856 = vpop.f32.mrb[0].mxu0
        %v857 = vadd.f32 %v652, %v856
        %v858 = vpop.f32.mrb[0].mxu0
        %859 = vmatprep.mubr.bf16.mxu0 0
        %860 = vmatmul.mubr.bf16.gmra.mrb[0].mxu0 %v710
        %v861 = vpop.f32.mrb[0].mxu0
        %v862 = vadd.f32 %v652, %v861
        %v863 = vpop.f32.mrb[0].mxu0
        %v864 = vpop.f32.mrb[0].mxu0
        %v865 = vadd.f32 %v652, %v864
        %v866 = vpop.f32.mrb[0].mxu0
        %867 = vmatprep.mubr.bf16.mxu0 0
        %868 = vmatmul.mubr.bf16.gmra.mrb[0].mxu0 %v713
        %v869 = vpop.f32.mrb[0].mxu0
        %v870 = vadd.f32 %v652, %v869
        %v871 = vpop.f32.mrb[0].mxu0
        %v872 = vpop.f32.mrb[0].mxu0
        %v873 = vadd.f32 %v652, %v872
        %v874 = vpop.f32.mrb[0].mxu0
        %875 = vdwg.mxu0
        %v876 = vpack.c.bf16 %v753, %v750
        %v877 = vpack.c.bf16 %v761, %v758
        %v878 = vpack.c.bf16 %v769, %v766
        %v879 = vpack.c.bf16 %v777, %v774
        %v880 = vpack.c.bf16 %v785, %v782
        %v881 = vpack.c.bf16 %v793, %v790
        %v882 = vpack.c.bf16 %v801, %v798
        %v883 = vpack.c.bf16 %v809, %v806
        %v884 = vpack.c.bf16 %v817, %v814
        %v885 = vpack.c.bf16 %v825, %v822
        %v886 = vpack.c.bf16 %v833, %v830
        %v887 = vpack.c.bf16 %v841, %v838
        %v888 = vpack.c.bf16 %v849, %v846
        %v889 = vpack.c.bf16 %v857, %v854
        %v890 = vpack.c.bf16 %v865, %v862
        %v891 = vpack.c.bf16 %v873, %v870
        %v908 = vunpack.c.l.b16 %v876
        %v909 = vunpack.c.h.b16 %v876
        %v910 = vunpack.c.l.b16 %v877
        %v911 = vunpack.c.h.b16 %v877
        %v912 = vunpack.c.l.b16 %v878
        %v913 = vunpack.c.h.b16 %v878
        %v914 = vunpack.c.l.b16 %v879
        %v915 = vunpack.c.h.b16 %v879
        %v916 = vunpack.c.l.b16 %v880
        %v917 = vunpack.c.h.b16 %v880
        %v918 = vunpack.c.l.b16 %v881
        %v919 = vunpack.c.h.b16 %v881
        %v920 = vunpack.c.l.b16 %v882
        %v921 = vunpack.c.h.b16 %v882
        %v922 = vunpack.c.l.b16 %v883
        %v923 = vunpack.c.h.b16 %v883
        %v924 = vunpack.c.l.b16 %v884
        %v925 = vunpack.c.h.b16 %v884
        %v926 = vunpack.c.l.b16 %v885
        %v927 = vunpack.c.h.b16 %v885
        %v928 = vunpack.c.l.b16 %v886
        %v929 = vunpack.c.h.b16 %v886
        %v930 = vunpack.c.l.b16 %v887
        %v931 = vunpack.c.h.b16 %v887
        %v932 = vunpack.c.l.b16 %v888
        %v933 = vunpack.c.h.b16 %v888
        %v934 = vunpack.c.l.b16 %v889
        %v935 = vunpack.c.h.b16 %v889
        %v936 = vunpack.c.l.b16 %v890
        %v937 = vunpack.c.h.b16 %v890
        %v938 = vunpack.c.l.b16 %v891
        %v939 = vunpack.c.h.b16 %v891
        %v940 = vpack.c.b16 %v908, %v908
        %v941 = vpack.c.b16 %v909, %v909
        %v942 = vpack.c.b16 %v910, %v910
        %v943 = vpack.c.b16 %v911, %v911
        %v944 = vpack.c.b16 %v912, %v912
        %v945 = vpack.c.b16 %v913, %v913
        %v946 = vpack.c.b16 %v914, %v914
        %v947 = vpack.c.b16 %v915, %v915
        %v948 = vpack.c.b16 %v916, %v916
        %v949 = vpack.c.b16 %v917, %v917
        %v950 = vpack.c.b16 %v918, %v918
        %v951 = vpack.c.b16 %v919, %v919
        %v952 = vpack.c.b16 %v920, %v920
        %v953 = vpack.c.b16 %v921, %v921
        %v954 = vpack.c.b16 %v922, %v922
        %v955 = vpack.c.b16 %v923, %v923
        %v956 = vpack.c.b16 %v924, %v924
        %v957 = vpack.c.b16 %v925, %v925
        %v958 = vpack.c.b16 %v926, %v926
        %v959 = vpack.c.b16 %v927, %v927
        %v960 = vpack.c.b16 %v928, %v928
        %v961 = vpack.c.b16 %v929, %v929
        %v962 = vpack.c.b16 %v930, %v930
        %v963 = vpack.c.b16 %v931, %v931
        %v964 = vpack.c.b16 %v932, %v932
        %v965 = vpack.c.b16 %v933, %v933
        %v966 = vpack.c.b16 %v934, %v934
        %v967 = vpack.c.b16 %v935, %v935
        %v968 = vpack.c.b16 %v936, %v936
        %v969 = vpack.c.b16 %v937, %v937
        %v970 = vpack.c.b16 %v938, %v938
        %v971 = vpack.c.b16 %v939, %v939
        %1004 = vst [vmem:[%s239] sm:$0xf] %v940
        %1005 = vst [vmem:[%s239 + $0x4] sm:$0xf] %v941
        %1006 = vst [vmem:[%s239 + $0x8] sm:$0xf] %v942
        %1007 = vst [vmem:[%s239 + $0xc] sm:$0xf] %v943
        %1008 = vst [vmem:[%s239 + $0x10] sm:$0xf] %v944
        %1009 = vst [vmem:[%s239 + $0x14] sm:$0xf] %v945
        %1010 = vst [vmem:[%s239 + $0x18] sm:$0xf] %v946
        %1011 = vst [vmem:[%s239 + $0x1c] sm:$0xf] %v947
        %1012 = vst [vmem:[%s239 + $0x20] sm:$0xf] %v948
        %1013 = vst [vmem:[%s239 + $0x24] sm:$0xf] %v949
        %1014 = vst [vmem:[%s239 + $0x28] sm:$0xf] %v950
        %1015 = vst [vmem:[%s239 + $0x2c] sm:$0xf] %v951
        %1016 = vst [vmem:[%s239 + $0x30] sm:$0xf] %v952
        %1017 = vst [vmem:[%s239 + $0x34] sm:$0xf] %v953
        %1018 = vst [vmem:[%s239 + $0x38] sm:$0xf] %v954
        %1019 = vst [vmem:[%s239 + $0x3c] sm:$0xf] %v955
        %1020 = vst [vmem:[%s239 + $0x40] sm:$0xf] %v956
        %1021 = vst [vmem:[%s239 + $0x44] sm:$0xf] %v957
        %1022 = vst [vmem:[%s239 + $0x48] sm:$0xf] %v958
        %1023 = vst [vmem:[%s239 + $0x4c] sm:$0xf] %v959
        %1024 = vst [vmem:[%s239 + $0x50] sm:$0xf] %v960
        %1025 = vst [vmem:[%s239 + $0x54] sm:$0xf] %v961
        %1026 = vst [vmem:[%s239 + $0x58] sm:$0xf] %v962
        %1027 = vst [vmem:[%s239 + $0x5c] sm:$0xf] %v963
        %1028 = vst [vmem:[%s239 + $0x60] sm:$0xf] %v964
        %1029 = vst [vmem:[%s239 + $0x64] sm:$0xf] %v965
        %1030 = vst [vmem:[%s239 + $0x68] sm:$0xf] %v966
        %1031 = vst [vmem:[%s239 + $0x6c] sm:$0xf] %v967
        %1032 = vst [vmem:[%s239 + $0x70] sm:$0xf] %v968
        %1033 = vst [vmem:[%s239 + $0x74] sm:$0xf] %v969
        %1034 = vst [vmem:[%s239 + $0x78] sm:$0xf] %v970
        %1035 = vst [vmem:[%s239 + $0x7c] sm:$0xf] %v971
        %s1036 = smul.u32 32, %s17
        %p1037 = scmp.lt.s32.totalorder %s1036, 63
        %s1038 = scalar_select %p1037, %s1036, 63
        %s1039 = smul.addr %s1038, 4
        %s1040 = scalar_lea.vmem %s5, %s1039
        // Predicated region
        $region45: #{rpn_forward.1} parent=39 // pred_check
          %p1041 = pneg %p145
        $region46: #{rpn_forward.1} parent=39 // pred_check_branch
          %1043 = sbr.rel (%p1041) target = $region48
        $region47: #{rpn_forward.1} parent=39 // pred_region
          %s1044 = smul.u32 32, %s17
        $region48: #{rpn_forward.1} parent=39 // pred_fallthru
          _
      $region40: #{rpn_forward.1} parent=5 // pred_fallthru
        _
      %p1045 = scmp.le.s32.totalorder 2, %s12
      // Predicated region
      $region49: #{rpn_forward.1} parent=5 // pred_check
        %p1046 = pneg %p1045
      $region50: #{rpn_forward.1} parent=5 // pred_check_branch
        %1048 = sbr.rel (%p1046) target = $region52
      $region51: #{rpn_forward.1} parent=5 // pred_region
        %s1049 = ssub.s32 %s12, 2
        // Predicated region
        $region53: #{rpn_forward.1} parent=51 // pred_check
          %p1050 = pneg %p151
        $region54: #{rpn_forward.1} parent=51 // pred_check_branch
          %1052 = sbr.rel (%p1050) target = $region56
        $region55: #{rpn_forward.1} parent=51 // pred_region
          %s1053 = smul.u32 32, %s18
          %p1054 = scmp.lt.s32.totalorder %s1053, 63
          %s1055 = scalar_select %p1054, %s1053, 63
          %s1056 = smul.addr %s1055, 4
          %s1057 = scalar_lea.vmem %s5, %s1056
        $region56: #{rpn_forward.1} parent=51 // pred_fallthru
          _
      $region52: #{rpn_forward.1} parent=5 // pred_fallthru
        _
    $region6: #{rpn_forward.1} parent=1 // loop_footer
      %s16 = sadd.s32 1, %s12
    $region7: #{rpn_forward.1} parent=1 // loop_footer_branch
      %11 = sbr.rel target = $region3
    $region8: #{rpn_forward.1} parent=1 // loop_exit
      _
    %1058 = vsyncpa [#allocation3], 1
    %s1059 = scalar_lea.sflag [#allocation3], 1
    %1060 = vsyncpa %s1059, 1

</llo_original>
